<compile_context>
chip_gen: v7x
topology: tpu7x:2x2x1
jax: 0.10.0
libtpu: 0.0.40
codegen_flags: <defaults>
</compile_context>

<pallas_src>
import jax
import jax.numpy as jnp
from jax import lax
from jax.experimental import pallas as pl
from jax.experimental.pallas import tpu as pltpu

BN_EPS = 1e-5


def _conv_stats_kernel(w_ref, p_ref, y_ref, s_ref):
    """Pass 1: y_tile = W @ patches_tile; emit per-tile BN partial sums.

    w_ref: (Cout, CKK)   resident dense (flipped) conv-transpose weight
    p_ref: (CKK, TM)     im2col patches tile (spatial M on the lane axis)
    y_ref: (Cout, TM)    conv output tile (pre-BN), lane-dense stores
    s_ref: (Cout, 128)   per-tile partials: lane 0 = sum(y), lane 1 = sum(y*y)
    """
    y = jnp.dot(w_ref[...], p_ref[...], preferred_element_type=jnp.float32)
    y_ref[...] = y

    sum_c = jnp.sum(y, axis=1, keepdims=True)        # (Cout, 1)
    sq_c = jnp.sum(y * y, axis=1, keepdims=True)     # (Cout, 1)
    lane = lax.broadcasted_iota(jnp.int32, (y.shape[0], 128), 1)
    s_ref[...] = jnp.where(lane == 0, sum_c, 0.0) + jnp.where(lane == 1, sq_c, 0.0)


def _bn_relu_kernel(y_ref, scale_ref, shift_ref, o_ref):
    """Pass 2: out = relu(y * scale + shift)  (BN folded into scale/shift)."""
    o_ref[...] = jnp.maximum(
        y_ref[...] * scale_ref[...] + shift_ref[...], 0.0
    ).astype(o_ref.dtype)


def dcnn_block_forward(x, w_t, bias, gamma, beta, *, stride, padding, tm=1024):
    """x: (N, Cin, H, W); w_t: ConvTranspose2d weight (Cin, Cout, K, K).

    `bias` is accepted for API parity with nn.ConvTranspose2d but intentionally
    unused: a per-channel constant added before training-mode BatchNorm cancels
    exactly in (y - mean), so dropping it is an exact optimization.
    """
    del bias  # cancels in training-mode BN; dropping it is exact.

    N, Cin, H, W = x.shape
    Cin_w, Cout, K, K2 = w_t.shape
    assert K == K2 and Cin_w == Cin
    assert tm % 128 == 0
    crop = K - 1 - padding
    assert crop >= 0, "padding > kernel_size - 1 not supported"

    OH = (H - 1) * stride - 2 * padding + K
    OW = (W - 1) * stride - 2 * padding + K
    Mhw = OH * OW
    M_total = N * Mhw
    CKK = Cin * K * K

    # conv_transpose == conv(dilate(x, stride), flip(W), pad = K-1-padding).
    Hd = (H - 1) * stride + 1
    Wd = (W - 1) * stride + 1
    xd = jnp.zeros((N, Cin, Hd, Wd), x.dtype).at[:, :, ::stride, ::stride].set(x)
    xp = jnp.pad(xd, ((0, 0), (0, 0), (crop, crop), (crop, crop)))

    # im2col, built batch-major so NO XLA transpose is needed (stack -> reshape):
    #   patches[n, ci*K*K + kh*K + kw, oh*OW + ow] = xp[n, ci, oh+kh, ow+kw]
    cols = [xp[:, :, kh:kh + OH, kw:kw + OW] for kh in range(K) for kw in range(K)]
    patches = jnp.stack(cols, axis=2).reshape(N, CKK, Mhw)   # (N, Cin*K*K, OH*OW)

    # Dense conv weight: wm[co, ci*K*K + kh*K + kw] = w_t[ci, co, K-1-kh, K-1-kw]
    wm = jnp.flip(w_t, axis=(2, 3)).transpose(1, 0, 2, 3).reshape(Cout, CKK)

    # Pad the per-image spatial axis up to a tile multiple.  Zero columns contribute
    # 0 to both the conv output and the BN partial sums, so stats stay exact (we
    # divide by the true N*OH*OW).
    tm = min(tm, pl.cdiv(Mhw, 128) * 128)
    mp = pl.cdiv(Mhw, tm) * tm
    n_tiles = mp // tm
    patches = jnp.pad(patches, ((0, 0), (0, 0), (0, mp - Mhw)))

    cparams = pltpu.CompilerParams(
        dimension_semantics=("parallel", "parallel"),  # per-tile outputs only
        vmem_limit_bytes=32 * 1024 * 1024,
    )

    # --- Pass 1: tiled matmul + per-tile BN partials -------------------------
    y, stats = pl.pallas_call(
        _conv_stats_kernel,
        grid=(N, n_tiles),
        in_specs=[
            pl.BlockSpec((Cout, CKK), lambda n, i: (0, 0)),         # weight: resident
            pl.BlockSpec((None, CKK, tm), lambda n, i: (n, 0, i)),  # patches: streamed
        ],
        out_specs=[
            pl.BlockSpec((None, Cout, tm), lambda n, i: (n, 0, i)),       # y tile
            pl.BlockSpec((None, Cout, 128),
                         lambda n, i: (n * n_tiles + i, 0, 0)),            # partials
        ],
        out_shape=[
            jax.ShapeDtypeStruct((N, Cout, mp), jnp.float32),
            jax.ShapeDtypeStruct((N * n_tiles, Cout, 128), jnp.float32),
        ],
        compiler_params=cparams,
    )(wm, patches)

    # --- Tiny glue: finalize global batch stats, fold BN into scale/shift ----
    sums = jnp.sum(stats[..., 0], axis=0)                 # (Cout,)
    sumsqs = jnp.sum(stats[..., 1], axis=0)               # (Cout,)
    mean = sums / M_total
    var = jnp.maximum(sumsqs / M_total - mean * mean, 0.0)  # f32 throughout
    scale = gamma * lax.rsqrt(var + BN_EPS)
    shift = beta - mean * scale

    # --- Pass 2: one mem-bound normalize + ReLU sweep ------------------------
    out = pl.pallas_call(
        _bn_relu_kernel,
        grid=(N, n_tiles),
        in_specs=[
            pl.BlockSpec((None, Cout, tm), lambda n, i: (n, 0, i)),
            pl.BlockSpec((Cout, 1), lambda n, i: (0, 0)),            # scale: resident
            pl.BlockSpec((Cout, 1), lambda n, i: (0, 0)),            # shift: resident
        ],
        out_specs=pl.BlockSpec((None, Cout, tm), lambda n, i: (n, 0, i)),
        out_shape=jax.ShapeDtypeStruct((N, Cout, mp), jnp.float32),
        compiler_params=cparams,
    )(y, scale.reshape(Cout, 1), shift.reshape(Cout, 1))

    # Drop the tile padding and reshape straight back to NCHW (no transpose).
    return out[:, :, :Mhw].reshape(N, Cout, OH, OW)


def _reference(x, w_t, bias, gamma, beta, *, stride, padding):
    """Pure-JAX reference: PyTorch ConvTranspose2d + BatchNorm2d(train) + ReLU."""
    K = w_t.shape[2]
    w_conv = jnp.flip(w_t, axis=(2, 3)).transpose(1, 0, 2, 3)   # (Cout, Cin, K, K)
    y = lax.conv_general_dilated(
        x, w_conv, window_strides=(1, 1),
        padding=[(K - 1 - padding,) * 2] * 2,
        lhs_dilation=(stride, stride),
        dimension_numbers=('NCHW', 'OIHW', 'NCHW'))
    y = y + bias.reshape(1, -1, 1, 1)
    mean = y.mean(axis=(0, 2, 3), keepdims=True)
    var = jnp.square(y - mean).mean(axis=(0, 2, 3), keepdims=True)
    y = (y - mean) / jnp.sqrt(var + BN_EPS)
    y = y * gamma.reshape(1, -1, 1, 1) + beta.reshape(1, -1, 1, 1)
    return jnp.maximum(y, 0.0)


if __name__ == "__main__":
    # DCNNBlock(num_in=4, num_filters=8, filter_size=3, stride=2, paddingsize=1)
    num_in, num_filters, filter_size, stride, paddingsize = 4, 8, 3, 2, 1
    N, H, W = 2, 16, 16

    key = jax.random.PRNGKey(0)
    kx, kw, kb, kg, kbeta = jax.random.split(key, 5)

    x = jax.random.normal(kx, (N, num_in, H, W), jnp.float32)
    # ConvTranspose2d weight shape: (in_channels, out_channels, kH, kW)
    w_t = 0.1 * jax.random.normal(
        kw, (num_in, num_filters, filter_size, filter_size), jnp.float32)
    bias = 0.1 * jax.random.normal(kb, (num_filters,), jnp.float32)
    # BatchNorm2d affine params (perturb gamma so the scale path is exercised)
    gamma = 1.0 + 0.05 * jax.random.normal(kg, (num_filters,), jnp.float32)
    beta = 0.05 * jax.random.normal(kbeta, (num_filters,), jnp.float32)

    # Small tile so the toy shape exercises a multi-tile grid (OH*OW = 31*31 = 961).
    fwd = jax.jit(dcnn_block_forward, static_argnames=("stride", "padding", "tm"))
    out = fwd(x, w_t, bias, gamma, beta, stride=stride, padding=paddingsize, tm=256)
    out = jax.block_until_ready(out)

    ref = _reference(x, w_t, bias, gamma, beta, stride=stride, padding=paddingsize)
    OH = (H - 1) * stride - 2 * paddingsize + filter_size
    OW = (W - 1) * stride - 2 * paddingsize + filter_size
    assert out.shape == ref.shape == (N, num_filters, OH, OW)
    assert jnp.allclose(out, ref, atol=1e-4, rtol=1e-4), "mismatch vs reference"

    print("KERNEL_OK")
</pallas_src>

<mosaic_0001>
module attributes {stable_mosaic.version = 11 : i64} {
  func.func @_bn_relu_kernel(%arg0: i32, %arg1: i32, %arg2: memref<1x8x256xf32, #tpu.memory_space<vmem>>, %arg3: memref<8x1xf32, #tpu.memory_space<vmem>>, %arg4: memref<8x1xf32, #tpu.memory_space<vmem>>, %arg5: memref<1x8x256xf32, #tpu.memory_space<vmem>>) attributes {dimension_semantics = [#tpu.dimension_semantics<parallel>, #tpu.dimension_semantics<parallel>], iteration_bounds = array<i64: 2, 4>, scalar_prefetch = 0 : i64, scratch_operands = 0 : i64, tpu.core_type = #tpu.core_type<tc>, window_params = [{transform_indices = @transform_0, window_bounds = array<i64: 1, 8, 256>}, {pipeline_mode = #tpu.pipeline_mode<synchronous>, transform_indices = @transform_1, window_bounds = array<i64: 8, 1>}, {pipeline_mode = #tpu.pipeline_mode<synchronous>, transform_indices = @transform_2, window_bounds = array<i64: 8, 1>}, {transform_indices = @transform_3, window_bounds = array<i64: 1, 8, 256>}]} {
    %c0 = arith.constant 0 : index
    %c0_0 = arith.constant 0 : index
    %c0_1 = arith.constant 0 : index
    %0 = vector.load %arg2[%c0, %c0_0, %c0_1] : memref<1x8x256xf32, #tpu.memory_space<vmem>>, vector<1x8x256xf32>
    %1 = vector.shape_cast %0 : vector<1x8x256xf32> to vector<8x256xf32>
    %c0_2 = arith.constant 0 : index
    %c0_3 = arith.constant 0 : index
    %2 = vector.load %arg3[%c0_2, %c0_3] : memref<8x1xf32, #tpu.memory_space<vmem>>, vector<8x1xf32>
    %3 = vector.broadcast %2 : vector<8x1xf32> to vector<8x256xf32>
    %4 = arith.mulf %1, %3 : vector<8x256xf32>
    %c0_4 = arith.constant 0 : index
    %c0_5 = arith.constant 0 : index
    %5 = vector.load %arg4[%c0_4, %c0_5] : memref<8x1xf32, #tpu.memory_space<vmem>>, vector<8x1xf32>
    %6 = vector.broadcast %5 : vector<8x1xf32> to vector<8x256xf32>
    %7 = arith.addf %4, %6 : vector<8x256xf32>
    %cst = arith.constant 0.000000e+00 : f32
    %8 = vector.broadcast %cst : f32 to vector<8x256xf32>
    %9 = arith.maximumf %7, %8 : vector<8x256xf32>
    %c0_6 = arith.constant 0 : index
    %c0_7 = arith.constant 0 : index
    %c0_8 = arith.constant 0 : index
    %10 = vector.load %arg5[%c0_6, %c0_7, %c0_8] : memref<1x8x256xf32, #tpu.memory_space<vmem>>, vector<1x8x256xf32>
    %11 = vector.shape_cast %10 : vector<1x8x256xf32> to vector<8x256xf32>
    %12 = vector.shape_cast %9 : vector<8x256xf32> to vector<1x8x256xf32>
    tpu.vector_store %arg5[%c0_6, %c0_7, %c0_8], %12 {strides = array<i32>} : memref<1x8x256xf32, #tpu.memory_space<vmem>>, vector<1x8x256xf32>,
    return
  }
  func.func @transform_0(%arg0: i32, %arg1: i32) -> (i32, i32, i32) {
    %c0_i32 = arith.constant 0 : i32
    %c0_i32_0 = arith.constant 0 : i32
    return %arg0, %c0_i32, %arg1 : i32, i32, i32
  }
  func.func @transform_1(%arg0: i32, %arg1: i32) -> (i32, i32) {
    %c0_i32 = arith.constant 0 : i32
    %c0_i32_0 = arith.constant 0 : i32
    %c0_i32_1 = arith.constant 0 : i32
    return %c0_i32, %c0_i32_0 : i32, i32
  }
  func.func @transform_2(%arg0: i32, %arg1: i32) -> (i32, i32) {
    %c0_i32 = arith.constant 0 : i32
    %c0_i32_0 = arith.constant 0 : i32
    %c0_i32_1 = arith.constant 0 : i32
    return %c0_i32, %c0_i32_0 : i32, i32
  }
  func.func @transform_3(%arg0: i32, %arg1: i32) -> (i32, i32, i32) {
    %c0_i32 = arith.constant 0 : i32
    %c0_i32_0 = arith.constant 0 : i32
    return %arg0, %c0_i32, %arg1 : i32, i32, i32
  }
}

module attributes {stable_mosaic.version = 11 : i64} {
  func.func @_conv_stats_kernel(%arg0: i32, %arg1: i32, %arg2: memref<8x36xf32, #tpu.memory_space<vmem>>, %arg3: memref<1x36x256xf32, #tpu.memory_space<vmem>>, %arg4: memref<1x8x256xf32, #tpu.memory_space<vmem>>, %arg5: memref<1x8x128xf32, #tpu.memory_space<vmem>>) attributes {dimension_semantics = [#tpu.dimension_semantics<parallel>, #tpu.dimension_semantics<parallel>], iteration_bounds = array<i64: 2, 4>, scalar_prefetch = 0 : i64, scratch_operands = 0 : i64, tpu.core_type = #tpu.core_type<tc>, window_params = [{pipeline_mode = #tpu.pipeline_mode<synchronous>, transform_indices = @transform_0, window_bounds = array<i64: 8, 36>}, {transform_indices = @transform_1, window_bounds = array<i64: 1, 36, 256>}, {transform_indices = @transform_2, window_bounds = array<i64: 1, 8, 256>}, {transform_indices = @transform_3, window_bounds = array<i64: 1, 8, 128>}]} {
    %c0 = arith.constant 0 : index
    %c0_0 = arith.constant 0 : index
    %0 = vector.load %arg2[%c0, %c0_0] : memref<8x36xf32, #tpu.memory_space<vmem>>, vector<8x36xf32>
    %c0_1 = arith.constant 0 : index
    %c0_2 = arith.constant 0 : index
    %c0_3 = arith.constant 0 : index
    %1 = vector.load %arg3[%c0_1, %c0_2, %c0_3] : memref<1x36x256xf32, #tpu.memory_space<vmem>>, vector<1x36x256xf32>
    %2 = vector.shape_cast %1 : vector<1x36x256xf32> to vector<36x256xf32>
    %cst = arith.constant dense<0.000000e+00> : vector<8x256xf32>
    %3 = tpu.matmul %0, %2, %cst {dimension_numbers = #tpu.dot_dimension_numbers<[1], [0], [0], [1], [0, 0, 1, 1], [], []>} : vector<8x36xf32>, vector<36x256xf32>, vector<8x256xf32> -> vector<8x256xf32>
    %c0_4 = arith.constant 0 : index
    %c0_5 = arith.constant 0 : index
    %c0_6 = arith.constant 0 : index
    %4 = vector.load %arg4[%c0_4, %c0_5, %c0_6] : memref<1x8x256xf32, #tpu.memory_space<vmem>>, vector<1x8x256xf32>
    %5 = vector.shape_cast %4 : vector<1x8x256xf32> to vector<8x256xf32>
    %6 = vector.shape_cast %3 : vector<8x256xf32> to vector<1x8x256xf32>
    tpu.vector_store %arg4[%c0_4, %c0_5, %c0_6], %6 {strides = array<i32>} : memref<1x8x256xf32, #tpu.memory_space<vmem>>, vector<1x8x256xf32>,
    %cst_7 = arith.constant dense<0.000000e+00> : vector<8xf32>
    %7 = vector.multi_reduction <add>, %3, %cst_7 [1] : vector<8x256xf32> to vector<8xf32>
    %8 = vector.shape_cast %7 : vector<8xf32> to vector<8x1xf32>
    %9 = arith.mulf %3, %3 : vector<8x256xf32>
    %cst_8 = arith.constant dense<0.000000e+00> : vector<8xf32>
    %10 = vector.multi_reduction <add>, %9, %cst_8 [1] : vector<8x256xf32> to vector<8xf32>
    %11 = vector.shape_cast %10 : vector<8xf32> to vector<8x1xf32>
    %12 = tpu.iota {dimensions = array<i32: 1>} : vector<8x128xi32>
    %c0_i32 = arith.constant 0 : i32
    %13 = vector.broadcast %c0_i32 : i32 to vector<8x128xi32>
    %14 = arith.cmpi eq, %12, %13 : vector<8x128xi32>
    %cst_9 = arith.constant 0.000000e+00 : f32
    %15 = vector.shape_cast %8 : vector<8x1xf32> to vector<8x1xf32>
    %16 = vector.broadcast %15 : vector<8x1xf32> to vector<8x128xf32>
    %17 = vector.broadcast %cst_9 : f32 to vector<8x128xf32>
    %18 = arith.select %14, %16, %17 : vector<8x128xi1>, vector<8x128xf32>
    %c1_i32 = arith.constant 1 : i32
    %19 = vector.broadcast %c1_i32 : i32 to vector<8x128xi32>
    %20 = arith.cmpi eq, %12, %19 : vector<8x128xi32>
    %cst_10 = arith.constant 0.000000e+00 : f32
    %21 = vector.shape_cast %11 : vector<8x1xf32> to vector<8x1xf32>
    %22 = vector.broadcast %21 : vector<8x1xf32> to vector<8x128xf32>
    %23 = vector.broadcast %cst_10 : f32 to vector<8x128xf32>
    %24 = arith.select %20, %22, %23 : vector<8x128xi1>, vector<8x128xf32>
    %25 = arith.addf %18, %24 : vector<8x128xf32>
    %c0_11 = arith.constant 0 : index
    %c0_12 = arith.constant 0 : index
    %c0_13 = arith.constant 0 : index
    %26 = vector.load %arg5[%c0_11, %c0_12, %c0_13] : memref<1x8x128xf32, #tpu.memory_space<vmem>>, vector<1x8x128xf32>
    %27 = vector.shape_cast %26 : vector<1x8x128xf32> to vector<8x128xf32>
    %28 = vector.shape_cast %25 : vector<8x128xf32> to vector<1x8x128xf32>
    tpu.vector_store %arg5[%c0_11, %c0_12, %c0_13], %28 {strides = array<i32>} : memref<1x8x128xf32, #tpu.memory_space<vmem>>, vector<1x8x128xf32>,
    return
  }
  func.func @transform_0(%arg0: i32, %arg1: i32) -> (i32, i32) {
    %c0_i32 = arith.constant 0 : i32
    %c0_i32_0 = arith.constant 0 : i32
    %c0_i32_1 = arith.constant 0 : i32
    return %c0_i32, %c0_i32_0 : i32, i32
  }
  func.func @transform_1(%arg0: i32, %arg1: i32) -> (i32, i32, i32) {
    %c0_i32 = arith.constant 0 : i32
    %c0_i32_0 = arith.constant 0 : i32
    return %arg0, %c0_i32, %arg1 : i32, i32, i32
  }
  func.func @transform_2(%arg0: i32, %arg1: i32) -> (i32, i32, i32) {
    %c0_i32 = arith.constant 0 : i32
    %c0_i32_0 = arith.constant 0 : i32
    return %arg0, %c0_i32, %arg1 : i32, i32, i32
  }
  func.func @transform_3(%arg0: i32, %arg1: i32) -> (i32, i32, i32) {
    %c4_i32 = arith.constant 4 : i32
    %0 = arith.muli %arg0, %c4_i32 : i32
    %1 = arith.addi %0, %arg1 : i32
    %c0_i32 = arith.constant 0 : i32
    %c0_i32_0 = arith.constant 0 : i32
    %c0_i32_1 = arith.constant 0 : i32
    return %1, %c0_i32, %c0_i32_0 : i32, i32, i32
  }
}

</mosaic_0001>

<llo_original>
// kernel: dcnn_block_forward.2
$region0: #{dcnn_block_forward.2}
  #allocation0 [shape = 'u32[]', space=smem, size = 0x4, offset = 0x4, fixed_abs, tag = 'smem constant byte address 0x4 - core index']
  #allocation1 [shape = 'u32[144,128]{1,0:T(1,128)}', space=vmem, size = 0x12000, scoped, tag = 'internal scratch']
  %s0 = inlined_call_operand.vmem [shape: f32[8,36], index: 0, kind: input, shape index: {}]
  %s1 = inlined_call_operand.vmem [shape: f32[2,36,1024], index: 1, kind: input, shape index: {}]
  %s2 = inlined_call_operand.vmem [shape: f32[2,8,1024], index: 2, kind: output, shape index: {0}]
  %s3 = inlined_call_operand.vmem [shape: f32[8,8,128], index: 3, kind: output, shape index: {1}]
  %4 = xla_tuple %s2, %s3
  %s5 = sld [smem:[#allocation0]]
  $region72: #{dcnn_block_forward.2} parent=0
    _
  %s7 = ssub.s32 1, %s5
  %s8 = scalar_select 0, %s7, %s5
  $region1: #{dcnn_block_forward.2} parent=0
    #allocation2 [shape = 'u8[81920]{0}', space=vmem, size = 0x14000, scoped, tag = 'input window, operand 1']
    loop: start=0, step=1, limit=10
    $region2: #{dcnn_block_forward.2} parent=1 // loop_pre_header
      _
    $region3: #{dcnn_block_forward.2} parent=1 // loop_header
      %s10 = sphi 0, %s14
      %p11 = scmp.ge.s32.totalorder %s10, 10
      %s17 = sphi 0, %s29
      %s18 = sphi 0, %s25
      %s19 = sphi 0, %s17
      %s20 = sphi 0, %s18
      %s21 = sphi 0, %s19
      %s22 = sphi 0, %s20
      %s30 = sphi 0, %s30
      %s32 = sphi 0, %s30
      %s33 = sphi 0, %s32
      %s47 = sphi 0, %s33
      %s55 = sphi 0, %s57
      %s58 = sphi 0, %s55
      %s59 = sphi 0, %s58
      %s75 = sphi 0, %s59
      %s83 = sphi 0, %s85
      %s86 = sphi 0, %s83
      %s87 = sphi 0, %s86
      %s103 = sphi 0, %s87
      %s113 = sphi 0, %s115
      %s116 = sphi 0, %s113
      %s117 = sphi 0, %s116
      %s133 = sphi 0, %s117
    $region4: #{dcnn_block_forward.2} parent=1 // loop_header_branch
      %13 = sbr.rel (%p11) target = $region8
    $region5: #{dcnn_block_forward.2} parent=1 // loop_body
      %s15 = ssub.s32 %s10, 1
      %s16 = ssub.s32 %s10, 2
      %s23 = sadd.s32 1, %s18
      %p24 = scmp.ge.s32.totalorder %s23, 4
      %s25 = scalar_select %p24, 0, %s23
      %s26 = sadd.s32 1, %s17
      %s27 = scalar_select %p24, %s26, %s17
      %p28 = scmp.ge.s32.totalorder %s27, 2
      %s29 = scalar_select %p28, 0, %s27
      %s31 = sadd.s32 %s30, 1
      %p34 = scmp.eq.s32.totalorder %s10, 7
      %p35 = scmp.ne.s32.totalorder %s30, %s32
      %p36 = scmp.eq.s32.totalorder %s10, 0
      %p37 = por %p35, %p36
      %p38 = scmp.ne.s32.totalorder %s30, %s32
      %p39 = scmp.eq.s32.totalorder %s15, 7
      %p40 = por %p38, %p39
      %p41 = scmp.ne.s32.totalorder %s32, %s33
      %p42 = scmp.eq.s32.totalorder %s15, 0
      %p43 = por %p41, %p42
      %p44 = scmp.ne.s32.totalorder %s32, %s33
      %p45 = scmp.eq.s32.totalorder %s16, 7
      %p46 = por %p44, %p45
      %p48 = scmp.ne.s32.totalorder %s33, %s47
      %p49 = scmp.eq.s32.totalorder %s16, 0
      %p50 = por %p48, %p49
      %s51 = ssub.s32 %s17, %s29
      %s52 = ssub.s32 %s18, %s25
      %s53 = sor.u32 %s51, %s52
      %p54 = scmp.eq.s32.totalorder %s53, 0
      %s56 = sadd.s32 %s55, 1
      %s57 = scalar_select %p54, %s55, %s56
      %p60 = pneg %p54
      %p61 = scmp.eq.s32.totalorder %s10, 7
      %p62 = por %p60, %p61
      %p63 = scmp.ne.s32.totalorder %s55, %s58
      %p64 = scmp.eq.s32.totalorder %s10, 0
      %p65 = por %p63, %p64
      %p66 = scmp.ne.s32.totalorder %s55, %s58
      %p67 = scmp.eq.s32.totalorder %s15, 7
      %p68 = por %p66, %p67
      %p69 = scmp.ne.s32.totalorder %s58, %s59
      %p70 = scmp.eq.s32.totalorder %s15, 0
      %p71 = por %p69, %p70
      %p72 = scmp.ne.s32.totalorder %s58, %s59
      %p73 = scmp.eq.s32.totalorder %s16, 7
      %p74 = por %p72, %p73
      %p76 = scmp.ne.s32.totalorder %s59, %s75
      %p77 = scmp.eq.s32.totalorder %s16, 0
      %p78 = por %p76, %p77
      %s79 = ssub.s32 %s17, %s29
      %s80 = ssub.s32 %s18, %s25
      %s81 = sor.u32 %s79, %s80
      %p82 = scmp.eq.s32.totalorder %s81, 0
      %s84 = sadd.s32 %s83, 1
      %s85 = scalar_select %p82, %s83, %s84
      %p88 = pneg %p82
      %p89 = scmp.eq.s32.totalorder %s10, 7
      %p90 = por %p88, %p89
      %p91 = scmp.ne.s32.totalorder %s83, %s86
      %p92 = scmp.eq.s32.totalorder %s10, 0
      %p93 = por %p91, %p92
      %p94 = scmp.ne.s32.totalorder %s83, %s86
      %p95 = scmp.eq.s32.totalorder %s15, 7
      %p96 = por %p94, %p95
      %p97 = scmp.ne.s32.totalorder %s86, %s87
      %p98 = scmp.eq.s32.totalorder %s15, 0
      %p99 = por %p97, %p98
      %p100 = scmp.ne.s32.totalorder %s86, %s87
      %p101 = scmp.eq.s32.totalorder %s16, 7
      %p102 = por %p100, %p101
      %p104 = scmp.ne.s32.totalorder %s87, %s103
      %p105 = scmp.eq.s32.totalorder %s16, 0
      %p106 = por %p104, %p105
      %s107 = smul.u32 %s17, 4
      %s108 = sadd.s32 %s107, %s18
      %s109 = smul.u32 %s29, 4
      %s110 = sadd.s32 %s109, %s25
      %s111 = ssub.s32 %s108, %s110
      %p112 = scmp.eq.s32.totalorder %s111, 0
      %s114 = sadd.s32 %s113, 1
      %s115 = scalar_select %p112, %s113, %s114
      %p118 = pneg %p112
      %p119 = scmp.eq.s32.totalorder %s10, 7
      %p120 = por %p118, %p119
      %p121 = scmp.ne.s32.totalorder %s113, %s116
      %p122 = scmp.eq.s32.totalorder %s10, 0
      %p123 = por %p121, %p122
      %p124 = scmp.ne.s32.totalorder %s113, %s116
      %p125 = scmp.eq.s32.totalorder %s15, 7
      %p126 = por %p124, %p125
      %p127 = scmp.ne.s32.totalorder %s116, %s117
      %p128 = scmp.eq.s32.totalorder %s15, 0
      %p129 = por %p127, %p128
      %p130 = scmp.ne.s32.totalorder %s116, %s117
      %p131 = scmp.eq.s32.totalorder %s16, 7
      %p132 = por %p130, %p131
      %p134 = scmp.ne.s32.totalorder %s117, %s133
      %p135 = scmp.eq.s32.totalorder %s16, 0
      %p136 = por %p134, %p135
      %p137 = scmp.le.s32.totalorder 1, %s10
      %p138 = scmp.lt.s32.totalorder %s10, 9
      %p139 = pnand %p137, %p138
      %p140 = pneg %p139
      // Predicated region
      $region9: #{dcnn_block_forward.2} parent=5 // pred_check
        _
      $region10: #{dcnn_block_forward.2} parent=5 // pred_check_branch
        %142 = sbr.rel (%p139) target = $region12
      $region11: #{dcnn_block_forward.2} parent=5 // pred_region
        %s143 = ssub.s32 %s10, 1
        // Predicated region
        $region13: #{dcnn_block_forward.2} parent=11 // pred_check
          %p144 = pneg %p43
        $region14: #{dcnn_block_forward.2} parent=11 // pred_check_branch
          %146 = sbr.rel (%p144) target = $region16
        $region15: #{dcnn_block_forward.2} parent=11 // pred_region
          _
        $region16: #{dcnn_block_forward.2} parent=11 // pred_fallthru
          _
      $region12: #{dcnn_block_forward.2} parent=5 // pred_fallthru
        _
      %p147 = scmp.lt.s32.totalorder %s10, 8
      // Predicated region
      $region17: #{dcnn_block_forward.2} parent=5 // pred_check
        %p148 = pneg %p147
      $region18: #{dcnn_block_forward.2} parent=5 // pred_check_branch
        %150 = sbr.rel (%p148) target = $region20
      $region19: #{dcnn_block_forward.2} parent=5 // pred_region
        // Predicated region
        $region21: #{dcnn_block_forward.2} parent=19 // pred_check
          %p151 = pneg %p65
        $region22: #{dcnn_block_forward.2} parent=19 // pred_check_branch
          %153 = sbr.rel (%p151) target = $region24
        $region23: #{dcnn_block_forward.2} parent=19 // pred_region
          %s154 = sand.u32 %s55, 1
          %s155 = sand.u32 %s55, 1
          %s156 = smul.addr %s155, 80
          %s157 = scalar_lea.vmem [#allocation2], %s156
          %s158 = smul.u32 2, %s18
          %s159 = smul.addr %s17, 40
          %s160 = sadd.s32 %s158, %s159
          %s161 = smul.addr %s160, 8
          %s162 = scalar_lea.vmem %s1, %s161
          // Predicated region
          $region25: #{dcnn_block_forward.2} parent=23 // pred_check
            _
          $region26: #{dcnn_block_forward.2} parent=23 // pred_check_branch
            %164 = sbr.rel (0) target = $region28
          $region27: #{dcnn_block_forward.2} parent=23 // pred_region
            // Predicated region
            $region29: #{dcnn_block_forward.2} parent=27 // pred_check
              _
            $region30: #{dcnn_block_forward.2} parent=27 // pred_check_branch
              %166 = sbr.rel (0) target = $region32
            $region31: #{dcnn_block_forward.2} parent=27 // pred_region
              loop: start=0, step=1, limit=1
              $region33: #{dcnn_block_forward.2} parent=31 // loop_pre_header
                _
              $region34: #{dcnn_block_forward.2} parent=31 // loop_header
                %s168 = sphi 0, %s172
                %p169 = scmp.ge.s32.totalorder %s168, 1
                %s173 = sphi %s162, %s162
                %s174 = sphi %s157, %s157
              $region35: #{dcnn_block_forward.2} parent=31 // loop_header_branch
                %171 = sbr.rel (%p169) target = $region39
              $region36: #{dcnn_block_forward.2} parent=31 // loop_body
                %v175 = vld [vmem:[%s173] sm:$0xff]
                %176 = vst [vmem:[%s174] sm:$0xff] %v175
                %v177 = vld [vmem:[%s173 + $0x8] sm:$0xff]
                %178 = vst [vmem:[%s174 + $0x8] sm:$0xff] %v177
                %v179 = vld [vmem:[%s173 + $0x40] sm:$0xff]
                %180 = vst [vmem:[%s174 + $0x10] sm:$0xff] %v179
                %v181 = vld [vmem:[%s173 + $0x48] sm:$0xff]
                %182 = vst [vmem:[%s174 + $0x18] sm:$0xff] %v181
                %v183 = vld [vmem:[%s173 + $0x80] sm:$0xff]
                %184 = vst [vmem:[%s174 + $0x20] sm:$0xff] %v183
                %v185 = vld [vmem:[%s173 + $0x88] sm:$0xff]
                %186 = vst [vmem:[%s174 + $0x28] sm:$0xff] %v185
                %v187 = vld [vmem:[%s173 + $0xc0] sm:$0xff]
                %188 = vst [vmem:[%s174 + $0x30] sm:$0xff] %v187
                %v189 = vld [vmem:[%s173 + $0xc8] sm:$0xff]
                %190 = vst [vmem:[%s174 + $0x38] sm:$0xff] %v189
                %v191 = vld [vmem:[%s173 + $0x100] sm:$0xff]
                %192 = vst [vmem:[%s174 + $0x40] sm:$0xff] %v191
                %v193 = vld [vmem:[%s173 + $0x108] sm:$0xff]
                %194 = vst [vmem:[%s174 + $0x48] sm:$0xff] %v193
              $region37: #{dcnn_block_forward.2} parent=31 // loop_footer
                %s172 = sadd.s32 1, %s168
              $region38: #{dcnn_block_forward.2} parent=31 // loop_footer_branch
                %167 = sbr.rel target = $region34
              $region39: #{dcnn_block_forward.2} parent=31 // loop_exit
                _
            $region32: #{dcnn_block_forward.2} parent=27 // pred_fallthru
              _
            // Predicated region
            $region40: #{dcnn_block_forward.2} parent=27 // pred_check
              _
            $region41: #{dcnn_block_forward.2} parent=27 // pred_check_branch
              %196 = sbr.rel target = $region43
            $region42: #{dcnn_block_forward.2} parent=27 // pred_region
              _
            $region43: #{dcnn_block_forward.2} parent=27 // pred_fallthru
              _
          $region28: #{dcnn_block_forward.2} parent=23 // pred_fallthru
            _
          %197 = vnop
        $region24: #{dcnn_block_forward.2} parent=19 // pred_fallthru
          _
      $region20: #{dcnn_block_forward.2} parent=5 // pred_fallthru
        _
      %p198 = scmp.le.s32.totalorder 1, %s10
      %p199 = scmp.lt.s32.totalorder %s10, 9
      %p200 = pnand %p198, %p199
      %p201 = pneg %p200
      // Predicated region
      $region44: #{dcnn_block_forward.2} parent=5 // pred_check
        _
      $region45: #{dcnn_block_forward.2} parent=5 // pred_check_branch
        %203 = sbr.rel (%p200) target = $region47
      $region46: #{dcnn_block_forward.2} parent=5 // pred_region
        %s204 = ssub.s32 %s10, 1
        %s205 = sand.u32 %s58, 1
        %s206 = sand.u32 %s58, 1
        %s207 = smul.addr %s206, 80
        %s208 = scalar_lea.vmem [#allocation2], %s207
        // Predicated region
        $region48: #{dcnn_block_forward.2} parent=46 // pred_check
          %p209 = pneg %p71
        $region49: #{dcnn_block_forward.2} parent=46 // pred_check_branch
          %211 = sbr.rel (%p209) target = $region51
        $region50: #{dcnn_block_forward.2} parent=46 // pred_region
          _
        $region51: #{dcnn_block_forward.2} parent=46 // pred_fallthru
          _
        %p212 = pneg %p43
        %p213 = pneg %p40
        %s214 = sand.u32 %s58, 1
        %s215 = sand.u32 %s58, 1
        %s216 = smul.addr %s215, 80
        %s217 = scalar_lea.vmem [#allocation2], %s216
        %p218 = pneg %p71
        %p219 = pneg %p68
        %p220 = pneg %p99
        %p221 = pneg %p96
        %s222 = smul.u32 2, %s20
        %p223 = scmp.lt.s32.totalorder %s19, 1
        %s224 = scalar_select %p223, %s19, 1
        %p225 = scmp.lt.s32.totalorder %s222, 7
        %s226 = scalar_select %p225, %s222, 7
        %s227 = smul.addr %s224, 8
        %s228 = sadd.s32 %s226, %s227
        %s229 = smul.addr %s228, 8
        %s230 = scalar_lea.vmem %s2, %s229
        %p231 = pneg %p129
        %p232 = pneg %p126
        %s233 = smul.u32 %s19, 4
        %s234 = sadd.s32 %s233, %s20
        %p235 = scmp.lt.s32.totalorder %s234, 7
        %s236 = scalar_select %p235, %s234, 7
        %s237 = smul.addr %s236, 8
        %s238 = scalar_lea.vmem %s3, %s237
        %s239 = smul.u32 2, %s20
        %s240 = smul.u32 2, %s20
        %p241 = scmp.lt.s32.totalorder %s19, 1
        %s242 = scalar_select %p241, %s19, 1
        %p243 = scmp.lt.s32.totalorder %s240, 7
        %s244 = scalar_select %p243, %s240, 7
        %s245 = smul.addr %s242, 8
        %s246 = sadd.s32 %s244, %s245
        %s247 = smul.addr %s246, 8
        %s248 = scalar_lea.vmem %s2, %s247
        %s249 = smul.u32 2, %s20
        %s250 = smul.u32 %s19, 4
        %s251 = sadd.s32 %s250, %s20
        %p252 = scmp.lt.s32.totalorder %s251, 7
        %s253 = scalar_select %p252, %s251, 7
        %s254 = smul.addr %s253, 8
        %s255 = scalar_lea.vmem %s3, %s254
        %s256 = smul.u32 %s19, 4
        %s257 = sadd.s32 %s256, %s20
        %v258 = vld [vmem:[%s0] sm:$0xff]
        %v259 = vld [vmem:[%s208] sm:$0xff]
        %v260 = vld [vmem:[%s208 + $0x8] sm:$0xff]
        %v261 = vld [vmem:[%s208 + $0x10] sm:$0xff]
        %v262 = vld [vmem:[%s208 + $0x18] sm:$0xff]
        %v263 = vld [vmem:[%s208 + $0x20] sm:$0xff]
        %v264 = vld [vmem:[%s208 + $0x28] sm:$0xff]
        %v265 = vld [vmem:[%s208 + $0x30] sm:$0xff]
        %v266 = vld [vmem:[%s208 + $0x38] sm:$0xff]
        %v267 = vld [vmem:[%s208 + $0x40] sm:$0xf]
        %v268 = vld [vmem:[%s208 + $0x48] sm:$0xf]
        %vm269 = vcmask 293888
        %v271 = vsel %vm269, %v258, 0
        %vm273 = vcmask 1043456
        %v275 = vsel %vm273, %v267, 0
        %v278 = vsel %vm273, %v268, 0
        %280 = vmatprep.subr.mxu0 %v260
        %281 = vmatpush1.msra.mxu0 %v259
        %282 = vmatprep.subr.mxu0 %v262
        %283 = vmatpush1.msra.mxu0 %v261
        %284 = vmatprep.subr.mxu0 %v264
        %285 = vmatpush1.msra.mxu0 %v263
        %286 = vmatprep.subr.mxu0 %v266
        %287 = vmatpush1.msra.mxu0 %v265
        %288 = vmatprep.subr.mxu0 %v278
        %289 = vmatpush1.msra.mxu0 %v275
        %290 = vmatprep.subr.mxu0 0.0
        %291 = vmatpush1.msra.mxu0 0.0
        %292 = vmatprep.subr.mxu0 0.0
        %293 = vmatpush1.msra.mxu0 0.0
        %294 = vmatprep.subr.mxu0 0.0
        %295 = vmatpush1.msra.mxu0 0.0
        %296 = vmatprep.subr.mxu0 0.0
        %297 = vmatpush1.msra.mxu0 0.0
        %298 = vmatprep.subr.mxu0 0.0
        %299 = vmatpush1.msra.mxu0 0.0
        %300 = vmatprep.subr.mxu0 0.0
        %301 = vmatpush1.msra.mxu0 0.0
        %302 = vmatprep.subr.mxu0 0.0
        %303 = vmatpush1.msra.mxu0 0.0
        %304 = vmatprep.subr.mxu0 0.0
        %305 = vmatpush1.msra.mxu0 0.0
        %306 = vmatprep.subr.mxu0 0.0
        %307 = vmatpush1.msra.mxu0 0.0
        %308 = vmatprep.subr.mxu0 0.0
        %309 = vmatpush1.msra.mxu0 0.0
        %310 = vmatprep.subr.mxu0 0.0
        %311 = vmatpush1.msra.mxu0 0.0
        %312 = vmatprep.subr.mxu0 0.0
        %313 = vmatpush1.msra.mxu0 0.0
        %314 = vmatprep.subr.mxu0 0.0
        %315 = vmatpush1.msra.mxu0 0.0
        %316 = vmatprep.subr.mxu0 0.0
        %317 = vmatpush1.msra.mxu0 0.0
        %318 = vmatprep.subr.mxu0 0.0
        %319 = vmatpush1.msra.mxu0 0.0
        %320 = vmatprep.subr.mxu0 0.0
        %321 = vmatpush1.msra.mxu0 0.0
        %322 = vmatprep.subr.mxu0 0.0
        %323 = vmatpush1.msra.mxu0 0.0
        %324 = vmatprep.subr.mxu0 0.0
        %325 = vmatpush1.msra.mxu0 0.0
        %326 = vmatprep.subr.mxu0 0.0
        %327 = vmatpush1.msra.mxu0 0.0
        %328 = vmatprep.subr.mxu0 0.0
        %329 = vmatpush1.msra.mxu0 0.0
        %330 = vmatprep.subr.mxu0 0.0
        %331 = vmatpush1.msra.mxu0 0.0
        %332 = vmatprep.subr.mxu0 0.0
        %333 = vmatpush1.msra.mxu0 0.0
        %334 = vmatprep.subr.mxu0 0.0
        %335 = vmatpush1.msra.mxu0 0.0
        %336 = vmatprep.subr.mxu0 0.0
        %337 = vmatpush1.msra.mxu0 0.0
        %338 = vmatprep.subr.mxu0 0.0
        %339 = vmatpush1.msra.mxu0 0.0
        %340 = vmatprep.subr.mxu0 0.0
        %341 = vmatpush1.msra.mxu0 0.0
        %342 = vmatprep.subr.mxu0 0.0
        %343 = vmatpush1.msra.mxu0 0.0
        %344 = vmatprep.mubr.f32.mxu0 0.0
        %345 = vmatmul.mubr.f32.gmra.mrb[0].mxu0 %v271
        %v346 = vpop.f32.mrb[0].mxu0
        %v347 = vadd.f32 0.0, %v346
        %v348 = vpop.f32.mrb[0].mxu0
        %v349 = vadd.f32 0.0, %v348
        %350 = vdwg.mxu0
        %351 = vst [vmem:[%s248] sm:$0xff] %v347
        %352 = vst [vmem:[%s248 + $0x8] sm:$0xff] %v349
        %v353 = vadd.f32 %v347, %v349
        %354 = vadd.xlane.f32.xlu0 %v353
        %v355 = vpop.xlane.xlu0 %354
        %v356 = vmul.f32 %v347, %v347
        %v357 = vmul.f32 %v349, %v349
        %v358 = vadd.f32 %v356, %v357
        %359 = vadd.xlane.f32.xlu0 %v358
        %v360 = vpop.xlane.xlu0 %359
        %v361 = vlaneseq
        %v362 = vand.u32 %v361, 127
        %vm363 = vcmp.eq.s32.totalorder %v362, 0
        %v364 = vsel %vm363, %v355, 0.0
        %vm365 = vcmp.eq.s32.totalorder %v362, 1
        %v366 = vsel %vm365, %v360, 0.0
        %v367 = vadd.f32 %v364, %v366
        %368 = vst [vmem:[%s255] sm:$0xff] %v367
        %s369 = smul.u32 2, %s20
        %p370 = scmp.lt.s32.totalorder %s19, 1
        %s371 = scalar_select %p370, %s19, 1
        %p372 = scmp.lt.s32.totalorder %s369, 7
        %s373 = scalar_select %p372, %s369, 7
        %s374 = smul.addr %s371, 8
        %s375 = sadd.s32 %s373, %s374
        %s376 = smul.addr %s375, 8
        %s377 = scalar_lea.vmem %s2, %s376
        %s378 = smul.u32 %s19, 4
        %s379 = sadd.s32 %s378, %s20
        %p380 = scmp.lt.s32.totalorder %s379, 7
        %s381 = scalar_select %p380, %s379, 7
        %s382 = smul.addr %s381, 8
        %s383 = scalar_lea.vmem %s3, %s382
        // Predicated region
        $region52: #{dcnn_block_forward.2} parent=46 // pred_check
          %p384 = pneg %p96
        $region53: #{dcnn_block_forward.2} parent=46 // pred_check_branch
          %386 = sbr.rel (%p384) target = $region55
        $region54: #{dcnn_block_forward.2} parent=46 // pred_region
          %s387 = smul.u32 2, %s20
        $region55: #{dcnn_block_forward.2} parent=46 // pred_fallthru
          _
        // Predicated region
        $region56: #{dcnn_block_forward.2} parent=46 // pred_check
          %p388 = pneg %p126
        $region57: #{dcnn_block_forward.2} parent=46 // pred_check_branch
          %390 = sbr.rel (%p388) target = $region59
        $region58: #{dcnn_block_forward.2} parent=46 // pred_region
          %s391 = smul.u32 %s19, 4
          %s392 = sadd.s32 %s391, %s20
        $region59: #{dcnn_block_forward.2} parent=46 // pred_fallthru
          _
      $region47: #{dcnn_block_forward.2} parent=5 // pred_fallthru
        _
      %p393 = scmp.le.s32.totalorder 2, %s10
      // Predicated region
      $region60: #{dcnn_block_forward.2} parent=5 // pred_check
        %p394 = pneg %p393
      $region61: #{dcnn_block_forward.2} parent=5 // pred_check_branch
        %396 = sbr.rel (%p394) target = $region63
      $region62: #{dcnn_block_forward.2} parent=5 // pred_region
        %s397 = ssub.s32 %s10, 2
        // Predicated region
        $region64: #{dcnn_block_forward.2} parent=62 // pred_check
          %p398 = pneg %p102
        $region65: #{dcnn_block_forward.2} parent=62 // pred_check_branch
          %400 = sbr.rel (%p398) target = $region67
        $region66: #{dcnn_block_forward.2} parent=62 // pred_region
          %s401 = smul.u32 2, %s22
          %p402 = scmp.lt.s32.totalorder %s21, 1
          %s403 = scalar_select %p402, %s21, 1
          %p404 = scmp.lt.s32.totalorder %s401, 7
          %s405 = scalar_select %p404, %s401, 7
          %s406 = smul.addr %s403, 8
          %s407 = sadd.s32 %s405, %s406
          %s408 = smul.addr %s407, 8
          %s409 = scalar_lea.vmem %s2, %s408
        $region67: #{dcnn_block_forward.2} parent=62 // pred_fallthru
          _
        // Predicated region
        $region68: #{dcnn_block_forward.2} parent=62 // pred_check
          %p410 = pneg %p132
        $region69: #{dcnn_block_forward.2} parent=62 // pred_check_branch
          %412 = sbr.rel (%p410) target = $region71
        $region70: #{dcnn_block_forward.2} parent=62 // pred_region
          %s413 = smul.u32 %s21, 4
          %s414 = sadd.s32 %s413, %s22
          %p415 = scmp.lt.s32.totalorder %s414, 7
          %s416 = scalar_select %p415, %s414, 7
          %s417 = smul.addr %s416, 8
          %s418 = scalar_lea.vmem %s3, %s417
        $region71: #{dcnn_block_forward.2} parent=62 // pred_fallthru
          _
      $region63: #{dcnn_block_forward.2} parent=5 // pred_fallthru
        _
    $region6: #{dcnn_block_forward.2} parent=1 // loop_footer
      %s14 = sadd.s32 1, %s10
    $region7: #{dcnn_block_forward.2} parent=1 // loop_footer_branch
      %9 = sbr.rel target = $region3
    $region8: #{dcnn_block_forward.2} parent=1 // loop_exit
      _

// kernel: dcnn_block_forward.3
$region0: #{dcnn_block_forward.3}
  #allocation0 [shape = 'u32[]', space=smem, size = 0x4, offset = 0x4, fixed_abs, tag = 'smem constant byte address 0x4 - core index']
  #allocation1 [shape = 'u32[144,128]{1,0:T(1,128)}', space=vmem, size = 0x12000, scoped, tag = 'internal scratch']
  %s0 = inlined_call_operand.vmem [shape: f32[2,8,1024], index: 0, kind: input, shape index: {}]
  %s1 = inlined_call_operand.vmem [shape: f32[8,1], index: 1, kind: input, shape index: {}]
  %s2 = inlined_call_operand.vmem [shape: f32[8,1], index: 2, kind: input, shape index: {}]
  %s3 = inlined_call_operand.vmem [shape: f32[2,8,1024], index: 3, kind: output, shape index: {}]
  %s4 = sld [smem:[#allocation0]]
  $region45: #{dcnn_block_forward.3} parent=0
    _
  %s6 = ssub.s32 1, %s4
  %s7 = scalar_select 0, %s6, %s4
  loop: start=0, step=1, limit=10
  $region2: #{dcnn_block_forward.3} parent=0 // loop_pre_header
    _
  $region3: #{dcnn_block_forward.3} parent=0 // loop_header
    %s9 = sphi 0, %s13
    %p10 = scmp.ge.s32.totalorder %s9, 10
    %s16 = sphi 0, %s28
    %s17 = sphi 0, %s24
    %s18 = sphi 0, %s16
    %s19 = sphi 0, %s17
    %s20 = sphi 0, %s18
    %s21 = sphi 0, %s19
    %s33 = sphi 0, %s35
    %s36 = sphi 0, %s33
    %s37 = sphi 0, %s36
    %s53 = sphi 0, %s37
    %s57 = sphi 0, %s57
    %s59 = sphi 0, %s57
    %s60 = sphi 0, %s59
    %s74 = sphi 0, %s60
    %s78 = sphi 0, %s78
    %s80 = sphi 0, %s78
    %s81 = sphi 0, %s80
    %s95 = sphi 0, %s81
    %s103 = sphi 0, %s105
    %s106 = sphi 0, %s103
    %s107 = sphi 0, %s106
    %s123 = sphi 0, %s107
  $region4: #{dcnn_block_forward.3} parent=0 // loop_header_branch
    %12 = sbr.rel (%p10) target = $region8
  $region5: #{dcnn_block_forward.3} parent=0 // loop_body
    %s14 = ssub.s32 %s9, 1
    %s15 = ssub.s32 %s9, 2
    %s22 = sadd.s32 1, %s17
    %p23 = scmp.ge.s32.totalorder %s22, 4
    %s24 = scalar_select %p23, 0, %s22
    %s25 = sadd.s32 1, %s16
    %s26 = scalar_select %p23, %s25, %s16
    %p27 = scmp.ge.s32.totalorder %s26, 2
    %s28 = scalar_select %p27, 0, %s26
    %s29 = ssub.s32 %s16, %s28
    %s30 = ssub.s32 %s17, %s24
    %s31 = sor.u32 %s29, %s30
    %p32 = scmp.eq.s32.totalorder %s31, 0
    %s34 = sadd.s32 %s33, 1
    %s35 = scalar_select %p32, %s33, %s34
    %p38 = pneg %p32
    %p39 = scmp.eq.s32.totalorder %s9, 7
    %p40 = por %p38, %p39
    %p41 = scmp.ne.s32.totalorder %s33, %s36
    %p42 = scmp.eq.s32.totalorder %s9, 0
    %p43 = por %p41, %p42
    %p44 = scmp.ne.s32.totalorder %s33, %s36
    %p45 = scmp.eq.s32.totalorder %s14, 7
    %p46 = por %p44, %p45
    %p47 = scmp.ne.s32.totalorder %s36, %s37
    %p48 = scmp.eq.s32.totalorder %s14, 0
    %p49 = por %p47, %p48
    %p50 = scmp.ne.s32.totalorder %s36, %s37
    %p51 = scmp.eq.s32.totalorder %s15, 7
    %p52 = por %p50, %p51
    %p54 = scmp.ne.s32.totalorder %s37, %s53
    %p55 = scmp.eq.s32.totalorder %s15, 0
    %p56 = por %p54, %p55
    %s58 = sadd.s32 %s57, 1
    %p61 = scmp.eq.s32.totalorder %s9, 7
    %p62 = scmp.ne.s32.totalorder %s57, %s59
    %p63 = scmp.eq.s32.totalorder %s9, 0
    %p64 = por %p62, %p63
    %p65 = scmp.ne.s32.totalorder %s57, %s59
    %p66 = scmp.eq.s32.totalorder %s14, 7
    %p67 = por %p65, %p66
    %p68 = scmp.ne.s32.totalorder %s59, %s60
    %p69 = scmp.eq.s32.totalorder %s14, 0
    %p70 = por %p68, %p69
    %p71 = scmp.ne.s32.totalorder %s59, %s60
    %p72 = scmp.eq.s32.totalorder %s15, 7
    %p73 = por %p71, %p72
    %p75 = scmp.ne.s32.totalorder %s60, %s74
    %p76 = scmp.eq.s32.totalorder %s15, 0
    %p77 = por %p75, %p76
    %s79 = sadd.s32 %s78, 1
    %p82 = scmp.eq.s32.totalorder %s9, 7
    %p83 = scmp.ne.s32.totalorder %s78, %s80
    %p84 = scmp.eq.s32.totalorder %s9, 0
    %p85 = por %p83, %p84
    %p86 = scmp.ne.s32.totalorder %s78, %s80
    %p87 = scmp.eq.s32.totalorder %s14, 7
    %p88 = por %p86, %p87
    %p89 = scmp.ne.s32.totalorder %s80, %s81
    %p90 = scmp.eq.s32.totalorder %s14, 0
    %p91 = por %p89, %p90
    %p92 = scmp.ne.s32.totalorder %s80, %s81
    %p93 = scmp.eq.s32.totalorder %s15, 7
    %p94 = por %p92, %p93
    %p96 = scmp.ne.s32.totalorder %s81, %s95
    %p97 = scmp.eq.s32.totalorder %s15, 0
    %p98 = por %p96, %p97
    %s99 = ssub.s32 %s16, %s28
    %s100 = ssub.s32 %s17, %s24
    %s101 = sor.u32 %s99, %s100
    %p102 = scmp.eq.s32.totalorder %s101, 0
    %s104 = sadd.s32 %s103, 1
    %s105 = scalar_select %p102, %s103, %s104
    %p108 = pneg %p102
    %p109 = scmp.eq.s32.totalorder %s9, 7
    %p110 = por %p108, %p109
    %p111 = scmp.ne.s32.totalorder %s103, %s106
    %p112 = scmp.eq.s32.totalorder %s9, 0
    %p113 = por %p111, %p112
    %p114 = scmp.ne.s32.totalorder %s103, %s106
    %p115 = scmp.eq.s32.totalorder %s14, 7
    %p116 = por %p114, %p115
    %p117 = scmp.ne.s32.totalorder %s106, %s107
    %p118 = scmp.eq.s32.totalorder %s14, 0
    %p119 = por %p117, %p118
    %p120 = scmp.ne.s32.totalorder %s106, %s107
    %p121 = scmp.eq.s32.totalorder %s15, 7
    %p122 = por %p120, %p121
    %p124 = scmp.ne.s32.totalorder %s107, %s123
    %p125 = scmp.eq.s32.totalorder %s15, 0
    %p126 = por %p124, %p125
    %p127 = scmp.le.s32.totalorder 1, %s9
    %p128 = scmp.lt.s32.totalorder %s9, 9
    %p129 = pnand %p127, %p128
    %p130 = pneg %p129
    // Predicated region
    $region9: #{dcnn_block_forward.3} parent=5 // pred_check
      _
    $region10: #{dcnn_block_forward.3} parent=5 // pred_check_branch
      %132 = sbr.rel (%p129) target = $region12
    $region11: #{dcnn_block_forward.3} parent=5 // pred_region
      %s133 = ssub.s32 %s9, 1
      // Predicated region
      $region13: #{dcnn_block_forward.3} parent=11 // pred_check
        %p134 = pneg %p70
      $region14: #{dcnn_block_forward.3} parent=11 // pred_check_branch
        %136 = sbr.rel (%p134) target = $region16
      $region15: #{dcnn_block_forward.3} parent=11 // pred_region
        _
      $region16: #{dcnn_block_forward.3} parent=11 // pred_fallthru
        _
      // Predicated region
      $region17: #{dcnn_block_forward.3} parent=11 // pred_check
        %p137 = pneg %p91
      $region18: #{dcnn_block_forward.3} parent=11 // pred_check_branch
        %139 = sbr.rel (%p137) target = $region20
      $region19: #{dcnn_block_forward.3} parent=11 // pred_region
        _
      $region20: #{dcnn_block_forward.3} parent=11 // pred_fallthru
        _
    $region12: #{dcnn_block_forward.3} parent=5 // pred_fallthru
      _
    %p140 = scmp.lt.s32.totalorder %s9, 8
    // Predicated region
    $region21: #{dcnn_block_forward.3} parent=5 // pred_check
      %p141 = pneg %p140
    $region22: #{dcnn_block_forward.3} parent=5 // pred_check_branch
      %143 = sbr.rel (%p141) target = $region24
    $region23: #{dcnn_block_forward.3} parent=5 // pred_region
      // Predicated region
      $region25: #{dcnn_block_forward.3} parent=23 // pred_check
        %p144 = pneg %p43
      $region26: #{dcnn_block_forward.3} parent=23 // pred_check_branch
        %146 = sbr.rel (%p144) target = $region28
      $region27: #{dcnn_block_forward.3} parent=23 // pred_region
        %s147 = smul.u32 2, %s17
        %p148 = scmp.lt.s32.totalorder %s16, 1
        %s149 = scalar_select %p148, %s16, 1
        %p150 = scmp.lt.s32.totalorder %s147, 7
        %s151 = scalar_select %p150, %s147, 7
        %s152 = smul.addr %s149, 8
        %s153 = sadd.s32 %s151, %s152
        %s154 = smul.addr %s153, 8
        %s155 = scalar_lea.vmem %s0, %s154
        %s156 = smul.u32 2, %s17
      $region28: #{dcnn_block_forward.3} parent=23 // pred_fallthru
        _
    $region24: #{dcnn_block_forward.3} parent=5 // pred_fallthru
      _
    %p157 = scmp.le.s32.totalorder 1, %s9
    %p158 = scmp.lt.s32.totalorder %s9, 9
    %p159 = pnand %p157, %p158
    %p160 = pneg %p159
    // Predicated region
    $region29: #{dcnn_block_forward.3} parent=5 // pred_check
      _
    $region30: #{dcnn_block_forward.3} parent=5 // pred_check_branch
      %162 = sbr.rel (%p159) target = $region32
    $region31: #{dcnn_block_forward.3} parent=5 // pred_region
      %s163 = ssub.s32 %s9, 1
      %s164 = smul.u32 2, %s19
      %p165 = scmp.lt.s32.totalorder %s18, 1
      %s166 = scalar_select %p165, %s18, 1
      %p167 = scmp.lt.s32.totalorder %s164, 7
      %s168 = scalar_select %p167, %s164, 7
      %s169 = smul.addr %s166, 8
      %s170 = sadd.s32 %s168, %s169
      %s171 = smul.addr %s170, 8
      %s172 = scalar_lea.vmem %s0, %s171
      %p173 = pneg %p49
      %p174 = pneg %p46
      %p175 = pneg %p70
      %p176 = pneg %p67
      %p177 = pneg %p91
      %p178 = pneg %p88
      %p179 = pneg %p119
      %p180 = pneg %p116
      %s181 = smul.u32 2, %s19
      %p182 = scmp.lt.s32.totalorder %s18, 1
      %s183 = scalar_select %p182, %s18, 1
      %p184 = scmp.lt.s32.totalorder %s181, 7
      %s185 = scalar_select %p184, %s181, 7
      %s186 = smul.addr %s183, 8
      %s187 = sadd.s32 %s185, %s186
      %s188 = smul.addr %s187, 8
      %s189 = scalar_lea.vmem %s3, %s188
      %s190 = smul.u32 2, %s19
      %p191 = scmp.lt.s32.totalorder %s18, 1
      %s192 = scalar_select %p191, %s18, 1
      %p193 = scmp.lt.s32.totalorder %s190, 7
      %s194 = scalar_select %p193, %s190, 7
      %s195 = smul.addr %s192, 8
      %s196 = sadd.s32 %s194, %s195
      %s197 = smul.addr %s196, 8
      %s198 = scalar_lea.vmem %s0, %s197
      %s199 = smul.u32 2, %s19
      %s200 = smul.u32 2, %s19
      %p201 = scmp.lt.s32.totalorder %s18, 1
      %s202 = scalar_select %p201, %s18, 1
      %p203 = scmp.lt.s32.totalorder %s200, 7
      %s204 = scalar_select %p203, %s200, 7
      %s205 = smul.addr %s202, 8
      %s206 = sadd.s32 %s204, %s205
      %s207 = smul.addr %s206, 8
      %s208 = scalar_lea.vmem %s3, %s207
      %s209 = smul.u32 2, %s19
      %v210 = vld [vmem:[%s198] sm:$0xff]
      %v211 = vld [vmem:[%s198 + $0x8] sm:$0xff]
      %v212 = vld [vmem:[%s1] sm:$0xff]
      %214 = vset.pattern.permute.xlu0 0
      %215 = vperm.xlu0 %214, %v212
      %v216 = vpop.permute.xlu0 %215
      %v218 = vmul.f32 %v210, %v216
      %v219 = vmul.f32 %v211, %v216
      %v220 = vld [vmem:[%s2] sm:$0xff]
      %222 = vset.pattern.permute.xlu0 0
      %223 = vperm.xlu0 %222, %v220
      %v224 = vpop.permute.xlu0 %223
      %v226 = vadd.f32 %v218, %v224
      %v227 = vadd.f32 %v219, %v224
      %v228 = vmax.f32 %v226, 0.0
      %v229 = vmax.f32 %v227, 0.0
      %230 = vst [vmem:[%s208] sm:$0xff] %v228
      %231 = vst [vmem:[%s208 + $0x8] sm:$0xff] %v229
      %s232 = smul.u32 2, %s19
      %p233 = scmp.lt.s32.totalorder %s18, 1
      %s234 = scalar_select %p233, %s18, 1
      %p235 = scmp.lt.s32.totalorder %s232, 7
      %s236 = scalar_select %p235, %s232, 7
      %s237 = smul.addr %s234, 8
      %s238 = sadd.s32 %s236, %s237
      %s239 = smul.addr %s238, 8
      %s240 = scalar_lea.vmem %s3, %s239
      // Predicated region
      $region33: #{dcnn_block_forward.3} parent=31 // pred_check
        %p241 = pneg %p116
      $region34: #{dcnn_block_forward.3} parent=31 // pred_check_branch
        %243 = sbr.rel (%p241) target = $region36
      $region35: #{dcnn_block_forward.3} parent=31 // pred_region
        %s244 = smul.u32 2, %s19
      $region36: #{dcnn_block_forward.3} parent=31 // pred_fallthru
        _
    $region32: #{dcnn_block_forward.3} parent=5 // pred_fallthru
      _
    %p245 = scmp.le.s32.totalorder 2, %s9
    // Predicated region
    $region37: #{dcnn_block_forward.3} parent=5 // pred_check
      %p246 = pneg %p245
    $region38: #{dcnn_block_forward.3} parent=5 // pred_check_branch
      %248 = sbr.rel (%p246) target = $region40
    $region39: #{dcnn_block_forward.3} parent=5 // pred_region
      %s249 = ssub.s32 %s9, 2
      // Predicated region
      $region41: #{dcnn_block_forward.3} parent=39 // pred_check
        %p250 = pneg %p122
      $region42: #{dcnn_block_forward.3} parent=39 // pred_check_branch
        %252 = sbr.rel (%p250) target = $region44
      $region43: #{dcnn_block_forward.3} parent=39 // pred_region
        %s253 = smul.u32 2, %s21
        %p254 = scmp.lt.s32.totalorder %s20, 1
        %s255 = scalar_select %p254, %s20, 1
        %p256 = scmp.lt.s32.totalorder %s253, 7
        %s257 = scalar_select %p256, %s253, 7
        %s258 = smul.addr %s255, 8
        %s259 = sadd.s32 %s257, %s258
        %s260 = smul.addr %s259, 8
        %s261 = scalar_lea.vmem %s3, %s260
      $region44: #{dcnn_block_forward.3} parent=39 // pred_fallthru
        _
    $region40: #{dcnn_block_forward.3} parent=5 // pred_fallthru
      _
  $region6: #{dcnn_block_forward.3} parent=0 // loop_footer
    %s13 = sadd.s32 1, %s9
  $region7: #{dcnn_block_forward.3} parent=0 // loop_footer_branch
    %8 = sbr.rel target = $region3
  $region8: #{dcnn_block_forward.3} parent=0 // loop_exit
    _

</llo_original>
